<compile_context>
chip_gen: v7x
topology: tpu7x:2x2x1
jax: 0.10.0
libtpu: 0.0.40
codegen_flags: <defaults>
</compile_context>

<pallas_src>
import functools

import jax
import jax.numpy as jnp
from jax.experimental import pallas as pl
from jax.experimental.pallas import tpu as pltpu


def _round_up(x, m):
    return (x + m - 1) // m * m


def _pos_emb_kernel(x_ref, w1p_ref, shift_ref, w2_ref, b2_ref, o_ref):
    # x_ref:     (1, TN, C_in)  channels-last input tile straight from xyz
    # w1p_ref:   (F, C_in)      conv1 weight with BN scale folded in
    # shift_ref: (F, 1)         folded BN shift + (scaled) conv1 bias
    # w2_ref:    (F, F)         conv2 weight
    # b2_ref:    (F, 1)         conv2 bias
    # o_ref:     (1, F, TN)     channels-first output tile (N on lanes)
    x = x_ref[0]                                    # (TN, C_in)
    # Tiny in-kernel transpose (only C_in ~ 3 rows) -> channels-first, N on lanes.
    xt = jnp.transpose(x)                           # (C_in, TN)
    w1p = w1p_ref[...]                              # (F, C_in)
    c_in = xt.shape[0]

    # Conv1d #1 (k=1): contraction is only C_in, so do C_in broadcast FMAs on
    # the VPU instead of an underfed MXU matmul (static unroll over channels).
    h = w1p[:, 0:1] * xt[0:1, :]                    # (F, TN)
    for c in range(1, c_in):
        h = h + w1p[:, c:c + 1] * xt[c:c + 1, :]

    # Folded BatchNorm shift (+ conv1 bias) and ReLU.
    h = jnp.maximum(h + shift_ref[...], 0.0)        # (F, TN)

    # Conv1d #2 (k=1): dense F x F matmul on the MXU, lane-dense along N.
    y = jnp.dot(w2_ref[...], h, preferred_element_type=jnp.float32)  # (F, TN)
    o_ref[0] = (y + b2_ref[...]).astype(o_ref.dtype)


def position_embedding_learned(xyz, params, *, tile_n=2048):
    """xyz: (B, N, C_in) float32.  Returns (B, num_pos_feats, N) (PyTorch NCL)."""
    B, N, C_in = xyz.shape
    w1, b1 = params["w1"], params["b1"]
    gamma, beta = params["gamma"], params["beta"]
    run_mean, run_var = params["run_mean"], params["run_var"]
    w2, b2 = params["w2"], params["b2"]
    F = w1.shape[0]
    eps = 1e-5

    # Fold BatchNorm1d (eval) and the conv1 bias into the conv1 weights / shift.
    # TODO(synk): training-mode BatchNorm (running-stat updates) is not implemented.
    scale = gamma / jnp.sqrt(run_var + eps)          # (F,)
    w1p = w1 * scale[:, None]                        # (F, C_in)
    shift_col = (beta - run_mean * scale + b1 * scale).reshape(F, 1)
    b2_col = b2.reshape(F, 1)

    # Lane-dense N tile: multiple of 128, as large as requested but no larger
    # than the 128-rounded problem.  No padding / trailing slice: the grid uses
    # cdiv and Pallas masks the partial last block.
    TN = min(_round_up(max(tile_n, 128), 128), _round_up(N, 128))
    n_blocks = pl.cdiv(N, TN)
    # v7x has two TensorCores: back off TN until the parallel grid has >= 2 units.
    while B * n_blocks < 2 and TN > 128:
        TN = max(128, _round_up(TN // 2, 128))
        n_blocks = pl.cdiv(N, TN)

    # VMEM budget: double-buffered in/out tiles + weights (all f32), with headroom.
    tile_bytes = 4 * TN * (C_in + F)                 # one input + one output tile
    weight_bytes = 4 * (F * C_in + F * F + 2 * F)
    vmem_limit = max(32 * 1024 * 1024,
                     2 * 2 * tile_bytes + 2 * weight_bytes + (1 << 20))

    cost = pl.CostEstimate(
        flops=2 * B * N * F * (C_in + F),
        transcendentals=0,
        bytes_accessed=4 * (B * N * C_in + B * F * N) + weight_bytes,
    )

    grid = (B, n_blocks)
    out = pl.pallas_call(
        _pos_emb_kernel,
        out_shape=jax.ShapeDtypeStruct((B, F, N), jnp.float32),
        grid_spec=pltpu.PrefetchScalarGridSpec(
            num_scalar_prefetch=0,
            grid=grid,
            in_specs=[
                pl.BlockSpec((1, TN, C_in), lambda b, n: (b, n, 0)),   # xyz tile
                pl.BlockSpec((F, C_in), lambda b, n: (0, 0)),          # w1 (BN folded)
                pl.BlockSpec((F, 1), lambda b, n: (0, 0)),             # shift
                pl.BlockSpec((F, F), lambda b, n: (0, 0)),             # w2
                pl.BlockSpec((F, 1), lambda b, n: (0, 0)),             # b2
            ],
            out_specs=pl.BlockSpec((1, F, TN), lambda b, n: (b, 0, n)),
        ),
        compiler_params=pltpu.CompilerParams(
            dimension_semantics=("parallel", "parallel"),
            vmem_limit_bytes=int(vmem_limit),
        ),
        cost_estimate=cost,
    )(xyz, w1p, shift_col, w2, b2_col)
    return out


def init_params(key, input_channel, num_pos_feats):
    ks = jax.random.split(key, 4)
    # Deterministic synthetic init (PyTorch-ish scales); not a checkpoint load.
    w1 = jax.random.normal(ks[0], (num_pos_feats, input_channel), jnp.float32) * 0.1
    b1 = jax.random.normal(ks[1], (num_pos_feats,), jnp.float32) * 0.01
    w2 = jax.random.normal(ks[2], (num_pos_feats, num_pos_feats), jnp.float32) * 0.1
    b2 = jax.random.normal(ks[3], (num_pos_feats,), jnp.float32) * 0.01
    # BatchNorm1d (eval): gamma=1, beta=0, running_mean=0, running_var=1.
    gamma = jnp.ones((num_pos_feats,), jnp.float32)
    beta = jnp.zeros((num_pos_feats,), jnp.float32)
    run_mean = jnp.zeros((num_pos_feats,), jnp.float32)
    run_var = jnp.ones((num_pos_feats,), jnp.float32)
    return dict(w1=w1, b1=b1, gamma=gamma, beta=beta,
                run_mean=run_mean, run_var=run_var, w2=w2, b2=b2)


def _reference(xyz, params):
    eps = 1e-5
    scale = params["gamma"] / jnp.sqrt(params["run_var"] + eps)
    shift = params["beta"] - params["run_mean"] * scale
    h = jnp.einsum("bnc,fc->bnf", xyz, params["w1"]) + params["b1"]
    h = jnp.maximum(h * scale + shift, 0.0)
    y = jnp.einsum("bnf,gf->bng", h, params["w2"]) + params["b2"]
    return jnp.transpose(y, (0, 2, 1))


if __name__ == "__main__":
    key = jax.random.PRNGKey(0)
    k_x, k_p = jax.random.split(key)

    # Small test shapes: 2 batches of 384 points with 3 coords -> 32 pos feats.
    # tile_n=256 exercises both N-tiling (grid=(2,2)) and the masked partial
    # trailing block (second block covers 256..511 but only 256..383 is valid).
    B, N, C_in, F = 2, 384, 3, 32
    xyz = jax.random.normal(k_x, (B, N, C_in), jnp.float32)
    params = init_params(k_p, C_in, F)

    fn = jax.jit(functools.partial(position_embedding_learned, tile_n=256))
    out = jax.block_until_ready(fn(xyz, params))

    ref = _reference(xyz, params)
    assert out.shape == (B, F, N), out.shape
    assert jnp.allclose(out, ref, atol=1e-4, rtol=1e-4), float(jnp.max(jnp.abs(out - ref)))

    print("KERNEL_OK")
</pallas_src>

<mosaic_0001>
module attributes {stable_mosaic.version = 11 : i64} {
  func.func @_pos_emb_kernel(%arg0: i32, %arg1: i32, %arg2: memref<1x256x3xf32, #tpu.memory_space<vmem>>, %arg3: memref<32x3xf32, #tpu.memory_space<vmem>>, %arg4: memref<32x1xf32, #tpu.memory_space<vmem>>, %arg5: memref<32x32xf32, #tpu.memory_space<vmem>>, %arg6: memref<32x1xf32, #tpu.memory_space<vmem>>, %arg7: memref<1x32x256xf32, #tpu.memory_space<vmem>>) attributes {dimension_semantics = [#tpu.dimension_semantics<parallel>, #tpu.dimension_semantics<parallel>], iteration_bounds = array<i64: 2, 2>, scalar_prefetch = 0 : i64, scratch_operands = 0 : i64, tpu.core_type = #tpu.core_type<tc>, window_params = [{transform_indices = @transform_0, window_bounds = array<i64: 1, 256, 3>}, {pipeline_mode = #tpu.pipeline_mode<synchronous>, transform_indices = @transform_1, window_bounds = array<i64: 32, 3>}, {pipeline_mode = #tpu.pipeline_mode<synchronous>, transform_indices = @transform_2, window_bounds = array<i64: 32, 1>}, {pipeline_mode = #tpu.pipeline_mode<synchronous>, transform_indices = @transform_3, window_bounds = array<i64: 32, 32>}, {pipeline_mode = #tpu.pipeline_mode<synchronous>, transform_indices = @transform_4, window_bounds = array<i64: 32, 1>}, {transform_indices = @transform_5, window_bounds = array<i64: 1, 32, 256>}]} {
    %c0 = arith.constant 0 : index
    %c0_0 = arith.constant 0 : index
    %c0_1 = arith.constant 0 : index
    %0 = vector.load %arg2[%c0, %c0_0, %c0_1] : memref<1x256x3xf32, #tpu.memory_space<vmem>>, vector<1x256x3xf32>
    %1 = vector.shape_cast %0 : vector<1x256x3xf32> to vector<256x3xf32>
    %2 = tpu.transpose %1, [1, 0] : vector<256x3xf32> -> vector<3x256xf32>
    %c0_2 = arith.constant 0 : index
    %c0_3 = arith.constant 0 : index
    %3 = vector.load %arg3[%c0_2, %c0_3] : memref<32x3xf32, #tpu.memory_space<vmem>>, vector<32x3xf32>
    %4 = vector.extract_strided_slice %3 {offsets = [0, 0], sizes = [32, 1], strides = [1, 1]} : vector<32x3xf32> to vector<32x1xf32>
    %5 = vector.extract_strided_slice %2 {offsets = [0, 0], sizes = [1, 256], strides = [1, 1]} : vector<3x256xf32> to vector<1x256xf32>
    %6 = vector.broadcast %4 : vector<32x1xf32> to vector<32x256xf32>
    %7 = vector.broadcast %5 : vector<1x256xf32> to vector<32x256xf32>
    %8 = arith.mulf %6, %7 : vector<32x256xf32>
    %9 = vector.extract_strided_slice %3 {offsets = [0, 1], sizes = [32, 1], strides = [1, 1]} : vector<32x3xf32> to vector<32x1xf32>
    %10 = vector.extract_strided_slice %2 {offsets = [1, 0], sizes = [1, 256], strides = [1, 1]} : vector<3x256xf32> to vector<1x256xf32>
    %11 = vector.broadcast %9 : vector<32x1xf32> to vector<32x256xf32>
    %12 = vector.broadcast %10 : vector<1x256xf32> to vector<32x256xf32>
    %13 = arith.mulf %11, %12 : vector<32x256xf32>
    %14 = arith.addf %8, %13 : vector<32x256xf32>
    %15 = vector.extract_strided_slice %3 {offsets = [0, 2], sizes = [32, 1], strides = [1, 1]} : vector<32x3xf32> to vector<32x1xf32>
    %16 = vector.extract_strided_slice %2 {offsets = [2, 0], sizes = [1, 256], strides = [1, 1]} : vector<3x256xf32> to vector<1x256xf32>
    %17 = vector.broadcast %15 : vector<32x1xf32> to vector<32x256xf32>
    %18 = vector.broadcast %16 : vector<1x256xf32> to vector<32x256xf32>
    %19 = arith.mulf %17, %18 : vector<32x256xf32>
    %20 = arith.addf %14, %19 : vector<32x256xf32>
    %c0_4 = arith.constant 0 : index
    %c0_5 = arith.constant 0 : index
    %21 = vector.load %arg4[%c0_4, %c0_5] : memref<32x1xf32, #tpu.memory_space<vmem>>, vector<32x1xf32>
    %22 = vector.broadcast %21 : vector<32x1xf32> to vector<32x256xf32>
    %23 = arith.addf %20, %22 : vector<32x256xf32>
    %cst = arith.constant 0.000000e+00 : f32
    %24 = vector.broadcast %cst : f32 to vector<32x256xf32>
    %25 = arith.maximumf %23, %24 : vector<32x256xf32>
    %c0_6 = arith.constant 0 : index
    %c0_7 = arith.constant 0 : index
    %26 = vector.load %arg5[%c0_6, %c0_7] : memref<32x32xf32, #tpu.memory_space<vmem>>, vector<32x32xf32>
    %cst_8 = arith.constant dense<0.000000e+00> : vector<32x256xf32>
    %27 = tpu.matmul %26, %25, %cst_8 {dimension_numbers = #tpu.dot_dimension_numbers<[1], [0], [0], [1], [0, 0, 1, 1], [], []>} : vector<32x32xf32>, vector<32x256xf32>, vector<32x256xf32> -> vector<32x256xf32>
    %c0_9 = arith.constant 0 : index
    %c0_10 = arith.constant 0 : index
    %28 = vector.load %arg6[%c0_9, %c0_10] : memref<32x1xf32, #tpu.memory_space<vmem>>, vector<32x1xf32>
    %29 = vector.broadcast %28 : vector<32x1xf32> to vector<32x256xf32>
    %30 = arith.addf %27, %29 : vector<32x256xf32>
    %c0_11 = arith.constant 0 : index
    %c0_12 = arith.constant 0 : index
    %c0_13 = arith.constant 0 : index
    %31 = vector.load %arg7[%c0_11, %c0_12, %c0_13] : memref<1x32x256xf32, #tpu.memory_space<vmem>>, vector<1x32x256xf32>
    %32 = vector.shape_cast %31 : vector<1x32x256xf32> to vector<32x256xf32>
    %33 = vector.shape_cast %30 : vector<32x256xf32> to vector<1x32x256xf32>
    tpu.vector_store %arg7[%c0_11, %c0_12, %c0_13], %33 {strides = array<i32>} : memref<1x32x256xf32, #tpu.memory_space<vmem>>, vector<1x32x256xf32>,
    return
  }
  func.func @transform_0(%arg0: i32, %arg1: i32) -> (i32, i32, i32) {
    %c0_i32 = arith.constant 0 : i32
    %c0_i32_0 = arith.constant 0 : i32
    return %arg0, %arg1, %c0_i32 : i32, i32, i32
  }
  func.func @transform_1(%arg0: i32, %arg1: i32) -> (i32, i32) {
    %c0_i32 = arith.constant 0 : i32
    %c0_i32_0 = arith.constant 0 : i32
    %c0_i32_1 = arith.constant 0 : i32
    return %c0_i32, %c0_i32_0 : i32, i32
  }
  func.func @transform_2(%arg0: i32, %arg1: i32) -> (i32, i32) {
    %c0_i32 = arith.constant 0 : i32
    %c0_i32_0 = arith.constant 0 : i32
    %c0_i32_1 = arith.constant 0 : i32
    return %c0_i32, %c0_i32_0 : i32, i32
  }
  func.func @transform_3(%arg0: i32, %arg1: i32) -> (i32, i32) {
    %c0_i32 = arith.constant 0 : i32
    %c0_i32_0 = arith.constant 0 : i32
    %c0_i32_1 = arith.constant 0 : i32
    return %c0_i32, %c0_i32_0 : i32, i32
  }
  func.func @transform_4(%arg0: i32, %arg1: i32) -> (i32, i32) {
    %c0_i32 = arith.constant 0 : i32
    %c0_i32_0 = arith.constant 0 : i32
    %c0_i32_1 = arith.constant 0 : i32
    return %c0_i32, %c0_i32_0 : i32, i32
  }
  func.func @transform_5(%arg0: i32, %arg1: i32) -> (i32, i32, i32) {
    %c0_i32 = arith.constant 0 : i32
    %c0_i32_0 = arith.constant 0 : i32
    return %arg0, %c0_i32, %arg1 : i32, i32, i32
  }
}

</mosaic_0001>

<llo_original>
// kernel: position_embedding_learned.1
$region0: #{position_embedding_learned.1}
  #allocation0 [shape = 'u32[]', space=smem, size = 0x4, offset = 0x4, fixed_abs, tag = 'smem constant byte address 0x4 - core index']
  #allocation1 [shape = 'u32[144,128]{1,0:T(1,128)}', space=vmem, size = 0x12000, scoped, tag = 'internal scratch']
  %s0 = inlined_call_operand.vmem [shape: f32[2,384,3], index: 0, kind: input, shape index: {}]
  %s1 = inlined_call_operand.vmem [shape: f32[32,3], index: 1, kind: input, shape index: {}]
  %s2 = inlined_call_operand.vmem [shape: f32[32,1], index: 2, kind: input, shape index: {}]
  %s3 = inlined_call_operand.vmem [shape: f32[32,32], index: 3, kind: input, shape index: {}]
  %s4 = inlined_call_operand.vmem [shape: f32[32,1], index: 4, kind: input, shape index: {}]
  %s5 = inlined_call_operand.hbm [shape: f32[2,32,384], index: 5, kind: output, shape index: {}]
  %s6 = sld [smem:[#allocation0]]
  $region53: #{position_embedding_learned.1} parent=0
    _
  %s8 = ssub.s32 1, %s6
  %s9 = scalar_select 0, %s8, %s6
  $region1: #{position_embedding_learned.1} parent=0
    #allocation2 [shape = 'u8[65536]{0}', space=vmem, size = 0x10000, scoped, tag = 'output window, operand 0']
    #allocation3 [shape = 's32[2]{0}', space=sflag, size = 0x8, scoped, tag = 'scoped memory for position_embedding_learned.1']
    %10 = vsyncpa [#allocation3], 0
    %s11 = scalar_lea.sflag [#allocation3], 1
    %12 = vsyncpa %s11, 0
    loop: start=0, step=1, limit=6
    $region2: #{position_embedding_learned.1} parent=1 // loop_pre_header
      _
    $region3: #{position_embedding_learned.1} parent=1 // loop_header
      %s14 = sphi 0, %s18
      %p15 = scmp.ge.s32.totalorder %s14, 6
      %s21 = sphi 0, %s33
      %s22 = sphi 0, %s29
      %s23 = sphi 0, %s21
      %s24 = sphi 0, %s22
      %s25 = sphi 0, %s23
      %s26 = sphi 0, %s24
      %s38 = sphi 0, %s40
      %s41 = sphi 0, %s38
      %s42 = sphi 0, %s41
      %s58 = sphi 0, %s42
      %s62 = sphi 0, %s62
      %s64 = sphi 0, %s62
      %s65 = sphi 0, %s64
      %s79 = sphi 0, %s65
      %s83 = sphi 0, %s83
      %s85 = sphi 0, %s83
      %s86 = sphi 0, %s85
      %s100 = sphi 0, %s86
      %s104 = sphi 0, %s104
      %s106 = sphi 0, %s104
      %s107 = sphi 0, %s106
      %s121 = sphi 0, %s107
      %s125 = sphi 0, %s125
      %s127 = sphi 0, %s125
      %s128 = sphi 0, %s127
      %s142 = sphi 0, %s128
      %s150 = sphi 0, %s152
      %s153 = sphi 0, %s150
      %s154 = sphi 0, %s153
      %s170 = sphi 0, %s154
    $region4: #{position_embedding_learned.1} parent=1 // loop_header_branch
      %17 = sbr.rel (%p15) target = $region8
    $region5: #{position_embedding_learned.1} parent=1 // loop_body
      %s19 = ssub.s32 %s14, 1
      %s20 = ssub.s32 %s14, 2
      %s27 = sadd.s32 1, %s22
      %p28 = scmp.ge.s32.totalorder %s27, 2
      %s29 = scalar_select %p28, 0, %s27
      %s30 = sadd.s32 1, %s21
      %s31 = scalar_select %p28, %s30, %s21
      %p32 = scmp.ge.s32.totalorder %s31, 2
      %s33 = scalar_select %p32, 0, %s31
      %s34 = ssub.s32 %s21, %s33
      %s35 = ssub.s32 %s22, %s29
      %s36 = sor.u32 %s34, %s35
      %p37 = scmp.eq.s32.totalorder %s36, 0
      %s39 = sadd.s32 %s38, 1
      %s40 = scalar_select %p37, %s38, %s39
      %p43 = pneg %p37
      %p44 = scmp.eq.s32.totalorder %s14, 3
      %p45 = por %p43, %p44
      %p46 = scmp.ne.s32.totalorder %s38, %s41
      %p47 = scmp.eq.s32.totalorder %s14, 0
      %p48 = por %p46, %p47
      %p49 = scmp.ne.s32.totalorder %s38, %s41
      %p50 = scmp.eq.s32.totalorder %s19, 3
      %p51 = por %p49, %p50
      %p52 = scmp.ne.s32.totalorder %s41, %s42
      %p53 = scmp.eq.s32.totalorder %s19, 0
      %p54 = por %p52, %p53
      %p55 = scmp.ne.s32.totalorder %s41, %s42
      %p56 = scmp.eq.s32.totalorder %s20, 3
      %p57 = por %p55, %p56
      %p59 = scmp.ne.s32.totalorder %s42, %s58
      %p60 = scmp.eq.s32.totalorder %s20, 0
      %p61 = por %p59, %p60
      %s63 = sadd.s32 %s62, 1
      %p66 = scmp.eq.s32.totalorder %s14, 3
      %p67 = scmp.ne.s32.totalorder %s62, %s64
      %p68 = scmp.eq.s32.totalorder %s14, 0
      %p69 = por %p67, %p68
      %p70 = scmp.ne.s32.totalorder %s62, %s64
      %p71 = scmp.eq.s32.totalorder %s19, 3
      %p72 = por %p70, %p71
      %p73 = scmp.ne.s32.totalorder %s64, %s65
      %p74 = scmp.eq.s32.totalorder %s19, 0
      %p75 = por %p73, %p74
      %p76 = scmp.ne.s32.totalorder %s64, %s65
      %p77 = scmp.eq.s32.totalorder %s20, 3
      %p78 = por %p76, %p77
      %p80 = scmp.ne.s32.totalorder %s65, %s79
      %p81 = scmp.eq.s32.totalorder %s20, 0
      %p82 = por %p80, %p81
      %s84 = sadd.s32 %s83, 1
      %p87 = scmp.eq.s32.totalorder %s14, 3
      %p88 = scmp.ne.s32.totalorder %s83, %s85
      %p89 = scmp.eq.s32.totalorder %s14, 0
      %p90 = por %p88, %p89
      %p91 = scmp.ne.s32.totalorder %s83, %s85
      %p92 = scmp.eq.s32.totalorder %s19, 3
      %p93 = por %p91, %p92
      %p94 = scmp.ne.s32.totalorder %s85, %s86
      %p95 = scmp.eq.s32.totalorder %s19, 0
      %p96 = por %p94, %p95
      %p97 = scmp.ne.s32.totalorder %s85, %s86
      %p98 = scmp.eq.s32.totalorder %s20, 3
      %p99 = por %p97, %p98
      %p101 = scmp.ne.s32.totalorder %s86, %s100
      %p102 = scmp.eq.s32.totalorder %s20, 0
      %p103 = por %p101, %p102
      %s105 = sadd.s32 %s104, 1
      %p108 = scmp.eq.s32.totalorder %s14, 3
      %p109 = scmp.ne.s32.totalorder %s104, %s106
      %p110 = scmp.eq.s32.totalorder %s14, 0
      %p111 = por %p109, %p110
      %p112 = scmp.ne.s32.totalorder %s104, %s106
      %p113 = scmp.eq.s32.totalorder %s19, 3
      %p114 = por %p112, %p113
      %p115 = scmp.ne.s32.totalorder %s106, %s107
      %p116 = scmp.eq.s32.totalorder %s19, 0
      %p117 = por %p115, %p116
      %p118 = scmp.ne.s32.totalorder %s106, %s107
      %p119 = scmp.eq.s32.totalorder %s20, 3
      %p120 = por %p118, %p119
      %p122 = scmp.ne.s32.totalorder %s107, %s121
      %p123 = scmp.eq.s32.totalorder %s20, 0
      %p124 = por %p122, %p123
      %s126 = sadd.s32 %s125, 1
      %p129 = scmp.eq.s32.totalorder %s14, 3
      %p130 = scmp.ne.s32.totalorder %s125, %s127
      %p131 = scmp.eq.s32.totalorder %s14, 0
      %p132 = por %p130, %p131
      %p133 = scmp.ne.s32.totalorder %s125, %s127
      %p134 = scmp.eq.s32.totalorder %s19, 3
      %p135 = por %p133, %p134
      %p136 = scmp.ne.s32.totalorder %s127, %s128
      %p137 = scmp.eq.s32.totalorder %s19, 0
      %p138 = por %p136, %p137
      %p139 = scmp.ne.s32.totalorder %s127, %s128
      %p140 = scmp.eq.s32.totalorder %s20, 3
      %p141 = por %p139, %p140
      %p143 = scmp.ne.s32.totalorder %s128, %s142
      %p144 = scmp.eq.s32.totalorder %s20, 0
      %p145 = por %p143, %p144
      %s146 = ssub.s32 %s21, %s33
      %s147 = ssub.s32 %s22, %s29
      %s148 = sor.u32 %s146, %s147
      %p149 = scmp.eq.s32.totalorder %s148, 0
      %s151 = sadd.s32 %s150, 1
      %s152 = scalar_select %p149, %s150, %s151
      %p155 = pneg %p149
      %p156 = scmp.eq.s32.totalorder %s14, 3
      %p157 = por %p155, %p156
      %p158 = scmp.ne.s32.totalorder %s150, %s153
      %p159 = scmp.eq.s32.totalorder %s14, 0
      %p160 = por %p158, %p159
      %p161 = scmp.ne.s32.totalorder %s150, %s153
      %p162 = scmp.eq.s32.totalorder %s19, 3
      %p163 = por %p161, %p162
      %p164 = scmp.ne.s32.totalorder %s153, %s154
      %p165 = scmp.eq.s32.totalorder %s19, 0
      %p166 = por %p164, %p165
      %p167 = scmp.ne.s32.totalorder %s153, %s154
      %p168 = scmp.eq.s32.totalorder %s20, 3
      %p169 = por %p167, %p168
      %p171 = scmp.ne.s32.totalorder %s154, %s170
      %p172 = scmp.eq.s32.totalorder %s20, 0
      %p173 = por %p171, %p172
      %p174 = scmp.le.s32.totalorder 1, %s14
      %p175 = scmp.lt.s32.totalorder %s14, 5
      %p176 = pnand %p174, %p175
      %p177 = pneg %p176
      // Predicated region
      $region9: #{position_embedding_learned.1} parent=5 // pred_check
        _
      $region10: #{position_embedding_learned.1} parent=5 // pred_check_branch
        %179 = sbr.rel (%p176) target = $region12
      $region11: #{position_embedding_learned.1} parent=5 // pred_region
        %s180 = ssub.s32 %s14, 1
        // Predicated region
        $region13: #{position_embedding_learned.1} parent=11 // pred_check
          %p181 = pneg %p75
        $region14: #{position_embedding_learned.1} parent=11 // pred_check_branch
          %183 = sbr.rel (%p181) target = $region16
        $region15: #{position_embedding_learned.1} parent=11 // pred_region
          _
        $region16: #{position_embedding_learned.1} parent=11 // pred_fallthru
          _
        // Predicated region
        $region17: #{position_embedding_learned.1} parent=11 // pred_check
          %p184 = pneg %p96
        $region18: #{position_embedding_learned.1} parent=11 // pred_check_branch
          %186 = sbr.rel (%p184) target = $region20
        $region19: #{position_embedding_learned.1} parent=11 // pred_region
          _
        $region20: #{position_embedding_learned.1} parent=11 // pred_fallthru
          _
        // Predicated region
        $region21: #{position_embedding_learned.1} parent=11 // pred_check
          %p187 = pneg %p117
        $region22: #{position_embedding_learned.1} parent=11 // pred_check_branch
          %189 = sbr.rel (%p187) target = $region24
        $region23: #{position_embedding_learned.1} parent=11 // pred_region
          _
        $region24: #{position_embedding_learned.1} parent=11 // pred_fallthru
          _
        // Predicated region
        $region25: #{position_embedding_learned.1} parent=11 // pred_check
          %p190 = pneg %p138
        $region26: #{position_embedding_learned.1} parent=11 // pred_check_branch
          %192 = sbr.rel (%p190) target = $region28
        $region27: #{position_embedding_learned.1} parent=11 // pred_region
          _
        $region28: #{position_embedding_learned.1} parent=11 // pred_fallthru
          _
      $region12: #{position_embedding_learned.1} parent=5 // pred_fallthru
        _
      %p193 = scmp.lt.s32.totalorder %s14, 4
      // Predicated region
      $region29: #{position_embedding_learned.1} parent=5 // pred_check
        %p194 = pneg %p193
      $region30: #{position_embedding_learned.1} parent=5 // pred_check_branch
        %196 = sbr.rel (%p194) target = $region32
      $region31: #{position_embedding_learned.1} parent=5 // pred_region
        // Predicated region
        $region33: #{position_embedding_learned.1} parent=31 // pred_check
          %p197 = pneg %p48
        $region34: #{position_embedding_learned.1} parent=31 // pred_check_branch
          %199 = sbr.rel (%p197) target = $region36
        $region35: #{position_embedding_learned.1} parent=31 // pred_region
          %s200 = smul.u32 32, %s22
          %s201 = ssub.s32 48, %s200
          %p202 = scmp.lt.s32.totalorder %s201, 32
          %s203 = scalar_select %p202, %s201, 32
          %s204 = smul.u32 128, %s203
          %p205 = scmp.lt.s32.totalorder %s21, 1
          %s206 = scalar_select %p205, %s21, 1
          %p207 = scmp.lt.s32.totalorder %s200, 47
          %s208 = scalar_select %p207, %s200, 47
          %s209 = smul.addr %s206, 48
          %s210 = sadd.s32 %s208, %s209
          %s211 = smul.addr %s210, 8
          %s212 = scalar_lea.vmem %s0, %s211
          %s213 = smul.u32 32, %s22
          %s214 = ssub.s32 48, %s213
          %p215 = scmp.lt.s32.totalorder %s214, 32
          %s216 = scalar_select %p215, %s214, 32
          %s217 = smul.u32 128, %s216
        $region36: #{position_embedding_learned.1} parent=31 // pred_fallthru
          _
      $region32: #{position_embedding_learned.1} parent=5 // pred_fallthru
        _
      %p218 = scmp.le.s32.totalorder 1, %s14
      %p219 = scmp.lt.s32.totalorder %s14, 5
      %p220 = pnand %p218, %p219
      %p221 = pneg %p220
      // Predicated region
      $region37: #{position_embedding_learned.1} parent=5 // pred_check
        _
      $region38: #{position_embedding_learned.1} parent=5 // pred_check_branch
        %223 = sbr.rel (%p220) target = $region40
      $region39: #{position_embedding_learned.1} parent=5 // pred_region
        %s224 = ssub.s32 %s14, 1
        %s225 = smul.u32 32, %s24
        %s226 = ssub.s32 48, %s225
        %p227 = scmp.lt.s32.totalorder %s226, 32
        %s228 = scalar_select %p227, %s226, 32
        %s229 = smul.u32 128, %s228
        %p230 = scmp.lt.s32.totalorder %s23, 1
        %s231 = scalar_select %p230, %s23, 1
        %p232 = scmp.lt.s32.totalorder %s225, 47
        %s233 = scalar_select %p232, %s225, 47
        %s234 = smul.addr %s231, 48
        %s235 = sadd.s32 %s233, %s234
        %s236 = smul.addr %s235, 8
        %s237 = scalar_lea.vmem %s0, %s236
        %p238 = pneg %p54
        %p239 = pneg %p51
        %p240 = pneg %p75
        %p241 = pneg %p72
        %p242 = pneg %p96
        %p243 = pneg %p93
        %p244 = pneg %p117
        %p245 = pneg %p114
        %p246 = pneg %p138
        %p247 = pneg %p135
        %p248 = pneg %p166
        %p249 = pneg %p163
        %s250 = sand.u32 %s153, 1
        %s251 = scalar_lea.sflag [#allocation3], %s250
        %s252 = sand.u32 %s153, 1
        %s253 = smul.addr %s252, 64
        %s254 = scalar_lea.vmem [#allocation2], %s253
        %s255 = smul.u32 32, %s24
        %s256 = ssub.s32 48, %s255
        %p257 = scmp.lt.s32.totalorder %s256, 32
        %s258 = scalar_select %p257, %s256, 32
        %s259 = smul.u32 128, %s258
        %p260 = scmp.lt.s32.totalorder %s23, 1
        %s261 = scalar_select %p260, %s23, 1
        %p262 = scmp.lt.s32.totalorder %s255, 47
        %s263 = scalar_select %p262, %s255, 47
        %s264 = smul.addr %s261, 48
        %s265 = sadd.s32 %s263, %s264
        %s266 = smul.addr %s265, 8
        %s267 = scalar_lea.vmem %s0, %s266
        %s268 = smul.u32 32, %s24
        %s269 = ssub.s32 48, %s268
        %p270 = scmp.lt.s32.totalorder %s269, 32
        %s271 = scalar_select %p270, %s269, 32
        %s272 = smul.u32 128, %s271
        %s273 = smul.u32 2, %s24
        %s274 = ssub.s32 3, %s273
        %p275 = scmp.lt.s32.totalorder %s274, 2
        %s276 = scalar_select %p275, %s274, 2
        %s277 = smul.u32 512, %s276
        %v278 = vld [vmem:[%s267] sm:$0xff]
        %v279 = vld [vmem:[%s267 + $0x8] sm:$0xff]
        %v280 = vld [vmem:[%s267 + $0x10] sm:$0xff]
        %v281 = vld [vmem:[%s267 + $0x18] sm:$0xff]
        %v282 = vld [vmem:[%s267 + $0x20] sm:$0xff]
        %v283 = vld [vmem:[%s267 + $0x28] sm:$0xff]
        %v284 = vld [vmem:[%s267 + $0x30] sm:$0xff]
        %v285 = vld [vmem:[%s267 + $0x38] sm:$0xff]
        %v286 = vld [vmem:[%s267 + $0x40] sm:$0xff]
        %v287 = vld [vmem:[%s267 + $0x48] sm:$0xff]
        %v288 = vld [vmem:[%s267 + $0x50] sm:$0xff]
        %v289 = vld [vmem:[%s267 + $0x58] sm:$0xff]
        %v290 = vld [vmem:[%s267 + $0x60] sm:$0xff]
        %v291 = vld [vmem:[%s267 + $0x68] sm:$0xff]
        %v292 = vld [vmem:[%s267 + $0x70] sm:$0xff]
        %v293 = vld [vmem:[%s267 + $0x78] sm:$0xff]
        %v294 = vld [vmem:[%s267 + $0x80] sm:$0xff]
        %v295 = vld [vmem:[%s267 + $0x88] sm:$0xff]
        %v296 = vld [vmem:[%s267 + $0x90] sm:$0xff]
        %v297 = vld [vmem:[%s267 + $0x98] sm:$0xff]
        %v298 = vld [vmem:[%s267 + $0xa0] sm:$0xff]
        %v299 = vld [vmem:[%s267 + $0xa8] sm:$0xff]
        %v300 = vld [vmem:[%s267 + $0xb0] sm:$0xff]
        %v301 = vld [vmem:[%s267 + $0xb8] sm:$0xff]
        %v302 = vld [vmem:[%s267 + $0xc0] sm:$0xff]
        %v303 = vld [vmem:[%s267 + $0xc8] sm:$0xff]
        %v304 = vld [vmem:[%s267 + $0xd0] sm:$0xff]
        %v305 = vld [vmem:[%s267 + $0xd8] sm:$0xff]
        %v306 = vld [vmem:[%s267 + $0xe0] sm:$0xff]
        %v307 = vld [vmem:[%s267 + $0xe8] sm:$0xff]
        %v308 = vld [vmem:[%s267 + $0xf0] sm:$0xff]
        %v309 = vld [vmem:[%s267 + $0xf8] sm:$0xff]
        %310 = vxpose.xlu0.b32.start [1/16] %v278, 128
        %311 = vxpose.xlu0.b32.cont [2/16] %v279, 128
        %312 = vxpose.xlu0.b32.cont [3/16] %v280, 128
        %313 = vxpose.xlu0.b32.cont [4/16] %v281, 128
        %314 = vxpose.xlu0.b32.cont [5/16] %v282, 128
        %315 = vxpose.xlu0.b32.cont [6/16] %v283, 128
        %316 = vxpose.xlu0.b32.cont [7/16] %v284, 128
        %317 = vxpose.xlu0.b32.cont [8/16] %v285, 128
        %318 = vxpose.xlu0.b32.cont [9/16] %v286, 128
        %319 = vxpose.xlu0.b32.cont [10/16] %v287, 128
        %320 = vxpose.xlu0.b32.cont [11/16] %v288, 128
        %321 = vxpose.xlu0.b32.cont [12/16] %v289, 128
        %322 = vxpose.xlu0.b32.cont [13/16] %v290, 128
        %323 = vxpose.xlu0.b32.cont [14/16] %v291, 128
        %324 = vxpose.xlu0.b32.cont [15/16] %v292, 128
        %325 = vxpose.xlu0.b32.end [16/16] %v293, 128
        %v326 = vpop.trf.xlu0
        %v327 = vpop.trf.xlu0
        %v328 = vpop.trf.xlu0
        %v329 = vpop.trf.xlu0
        %v330 = vpop.trf.xlu0
        %v331 = vpop.trf.xlu0
        %v332 = vpop.trf.xlu0
        %v333 = vpop.trf.xlu0
        %v334 = vpop.trf.xlu0
        %v335 = vpop.trf.xlu0
        %v336 = vpop.trf.xlu0
        %v337 = vpop.trf.xlu0
        %v338 = vpop.trf.xlu0
        %v339 = vpop.trf.xlu0
        %v340 = vpop.trf.xlu0
        %v341 = vpop.trf.xlu0
        %342 = vxpose.xlu0.b32.start [1/16] %v294, 128
        %343 = vxpose.xlu0.b32.cont [2/16] %v295, 128
        %344 = vxpose.xlu0.b32.cont [3/16] %v296, 128
        %345 = vxpose.xlu0.b32.cont [4/16] %v297, 128
        %346 = vxpose.xlu0.b32.cont [5/16] %v298, 128
        %347 = vxpose.xlu0.b32.cont [6/16] %v299, 128
        %348 = vxpose.xlu0.b32.cont [7/16] %v300, 128
        %349 = vxpose.xlu0.b32.cont [8/16] %v301, 128
        %350 = vxpose.xlu0.b32.cont [9/16] %v302, 128
        %351 = vxpose.xlu0.b32.cont [10/16] %v303, 128
        %352 = vxpose.xlu0.b32.cont [11/16] %v304, 128
        %353 = vxpose.xlu0.b32.cont [12/16] %v305, 128
        %354 = vxpose.xlu0.b32.cont [13/16] %v306, 128
        %355 = vxpose.xlu0.b32.cont [14/16] %v307, 128
        %356 = vxpose.xlu0.b32.cont [15/16] %v308, 128
        %357 = vxpose.xlu0.b32.end [16/16] %v309, 128
        %v358 = vpop.trf.xlu0
        %v359 = vpop.trf.xlu0
        %v360 = vpop.trf.xlu0
        %v361 = vpop.trf.xlu0
        %v362 = vpop.trf.xlu0
        %v363 = vpop.trf.xlu0
        %v364 = vpop.trf.xlu0
        %v365 = vpop.trf.xlu0
        %v366 = vpop.trf.xlu0
        %v367 = vpop.trf.xlu0
        %v368 = vpop.trf.xlu0
        %v369 = vpop.trf.xlu0
        %v370 = vpop.trf.xlu0
        %v371 = vpop.trf.xlu0
        %v372 = vpop.trf.xlu0
        %v373 = vpop.trf.xlu0
        %v374 = vld [vmem:[%s1] sm:$0xff]
        %v375 = vld [vmem:[%s1 + $0x8] sm:$0xff]
        %v376 = vld [vmem:[%s1 + $0x10] sm:$0xff]
        %v377 = vld [vmem:[%s1 + $0x18] sm:$0xff]
        %379 = vset.pattern.permute.xlu0 0
        %380 = vperm.xlu0 %379, %v374
        %v381 = vpop.permute.xlu0 %380
        %384 = vset.pattern.permute.xlu0 0
        %385 = vperm.xlu0 %384, %v375
        %v386 = vpop.permute.xlu0 %385
        %389 = vset.pattern.permute.xlu0 0
        %390 = vperm.xlu0 %389, %v376
        %v391 = vpop.permute.xlu0 %390
        %394 = vset.pattern.permute.xlu0 0
        %395 = vperm.xlu0 %394, %v377
        %v396 = vpop.permute.xlu0 %395
        %v398 = vlaneseq
        %v399 = vshrl.u32 %v398, 7
        %v400 = vsub.s32 0, %v399
        %v401 = vrot.slane %v326, %v400
        %v402 = vlaneseq
        %v403 = vshrl.u32 %v402, 7
        %v404 = vsub.s32 0, %v403
        %v405 = vrot.slane %v358, %v404
        %v406 = vmul.f32 %v381, %v401
        %v407 = vmul.f32 %v381, %v405
        %v408 = vmul.f32 %v386, %v401
        %v409 = vmul.f32 %v386, %v405
        %v410 = vmul.f32 %v391, %v401
        %v411 = vmul.f32 %v391, %v405
        %v412 = vmul.f32 %v396, %v401
        %v413 = vmul.f32 %v396, %v405
        %414 = vset.pattern.permute.xlu0 1
        %415 = vperm.xlu0 %414, %v374
        %v416 = vpop.permute.xlu0 %415
        %418 = vset.pattern.permute.xlu0 1
        %419 = vperm.xlu0 %418, %v375
        %v420 = vpop.permute.xlu0 %419
        %422 = vset.pattern.permute.xlu0 1
        %423 = vperm.xlu0 %422, %v376
        %v424 = vpop.permute.xlu0 %423
        %426 = vset.pattern.permute.xlu0 1
        %427 = vperm.xlu0 %426, %v377
        %v428 = vpop.permute.xlu0 %427
        %v430 = vlaneseq
        %v431 = vshrl.u32 %v430, 7
        %v432 = vsub.s32 1, %v431
        %v433 = vrot.slane %v326, %v432
        %v434 = vlaneseq
        %v435 = vshrl.u32 %v434, 7
        %v436 = vsub.s32 1, %v435
        %v437 = vrot.slane %v358, %v436
        %v438 = vmul.f32 %v416, %v433
        %v439 = vmul.f32 %v416, %v437
        %v440 = vmul.f32 %v420, %v433
        %v441 = vmul.f32 %v420, %v437
        %v442 = vmul.f32 %v424, %v433
        %v443 = vmul.f32 %v424, %v437
        %v444 = vmul.f32 %v428, %v433
        %v445 = vmul.f32 %v428, %v437
        %v446 = vadd.f32 %v406, %v438
        %v447 = vadd.f32 %v407, %v439
        %v448 = vadd.f32 %v408, %v440
        %v449 = vadd.f32 %v409, %v441
        %v450 = vadd.f32 %v410, %v442
        %v451 = vadd.f32 %v411, %v443
        %v452 = vadd.f32 %v412, %v444
        %v453 = vadd.f32 %v413, %v445
        %454 = vset.pattern.permute.xlu0 2
        %455 = vperm.xlu0 %454, %v374
        %v456 = vpop.permute.xlu0 %455
        %458 = vset.pattern.permute.xlu0 2
        %459 = vperm.xlu0 %458, %v375
        %v460 = vpop.permute.xlu0 %459
        %462 = vset.pattern.permute.xlu0 2
        %463 = vperm.xlu0 %462, %v376
        %v464 = vpop.permute.xlu0 %463
        %466 = vset.pattern.permute.xlu0 2
        %467 = vperm.xlu0 %466, %v377
        %v468 = vpop.permute.xlu0 %467
        %v470 = vlaneseq
        %v471 = vshrl.u32 %v470, 7
        %v472 = vsub.s32 2, %v471
        %v473 = vrot.slane %v326, %v472
        %v474 = vlaneseq
        %v475 = vshrl.u32 %v474, 7
        %v476 = vsub.s32 2, %v475
        %v477 = vrot.slane %v358, %v476
        %v478 = vmul.f32 %v456, %v473
        %v479 = vmul.f32 %v456, %v477
        %v480 = vmul.f32 %v460, %v473
        %v481 = vmul.f32 %v460, %v477
        %v482 = vmul.f32 %v464, %v473
        %v483 = vmul.f32 %v464, %v477
        %v484 = vmul.f32 %v468, %v473
        %v485 = vmul.f32 %v468, %v477
        %v486 = vadd.f32 %v446, %v478
        %v487 = vadd.f32 %v447, %v479
        %v488 = vadd.f32 %v448, %v480
        %v489 = vadd.f32 %v449, %v481
        %v490 = vadd.f32 %v450, %v482
        %v491 = vadd.f32 %v451, %v483
        %v492 = vadd.f32 %v452, %v484
        %v493 = vadd.f32 %v453, %v485
        %v494 = vld [vmem:[%s2] sm:$0xff]
        %v495 = vld [vmem:[%s2 + $0x8] sm:$0xff]
        %v496 = vld [vmem:[%s2 + $0x10] sm:$0xff]
        %v497 = vld [vmem:[%s2 + $0x18] sm:$0xff]
        %499 = vset.pattern.permute.xlu0 0
        %500 = vperm.xlu0 %499, %v494
        %v501 = vpop.permute.xlu0 %500
        %504 = vset.pattern.permute.xlu0 0
        %505 = vperm.xlu0 %504, %v495
        %v506 = vpop.permute.xlu0 %505
        %509 = vset.pattern.permute.xlu0 0
        %510 = vperm.xlu0 %509, %v496
        %v511 = vpop.permute.xlu0 %510
        %514 = vset.pattern.permute.xlu0 0
        %515 = vperm.xlu0 %514, %v497
        %v516 = vpop.permute.xlu0 %515
        %v518 = vadd.f32 %v486, %v501
        %v519 = vadd.f32 %v487, %v501
        %v520 = vadd.f32 %v488, %v506
        %v521 = vadd.f32 %v489, %v506
        %v522 = vadd.f32 %v490, %v511
        %v523 = vadd.f32 %v491, %v511
        %v524 = vadd.f32 %v492, %v516
        %v525 = vadd.f32 %v493, %v516
        %v526 = vmax.f32 %v518, 0.0
        %v527 = vmax.f32 %v519, 0.0
        %v528 = vmax.f32 %v520, 0.0
        %v529 = vmax.f32 %v521, 0.0
        %v530 = vmax.f32 %v522, 0.0
        %v531 = vmax.f32 %v523, 0.0
        %v532 = vmax.f32 %v524, 0.0
        %v533 = vmax.f32 %v525, 0.0
        %v534 = vld [vmem:[%s3] sm:$0xff]
        %v535 = vld [vmem:[%s3 + $0x8] sm:$0xff]
        %v536 = vld [vmem:[%s3 + $0x10] sm:$0xff]
        %v537 = vld [vmem:[%s3 + $0x18] sm:$0xff]
        %v538 = vld [vmem:[%s4] sm:$0xff]
        %v539 = vld [vmem:[%s4 + $0x8] sm:$0xff]
        %v540 = vld [vmem:[%s4 + $0x10] sm:$0xff]
        %v541 = vld [vmem:[%s4 + $0x18] sm:$0xff]
        %543 = vset.pattern.permute.xlu0 0
        %544 = vperm.xlu0 %543, %v538
        %v545 = vpop.permute.xlu0 %544
        %548 = vset.pattern.permute.xlu0 0
        %549 = vperm.xlu0 %548, %v539
        %v550 = vpop.permute.xlu0 %549
        %553 = vset.pattern.permute.xlu0 0
        %554 = vperm.xlu0 %553, %v540
        %v555 = vpop.permute.xlu0 %554
        %558 = vset.pattern.permute.xlu0 0
        %559 = vperm.xlu0 %558, %v541
        %v560 = vpop.permute.xlu0 %559
        %vm562 = vcmask 261120
        %v564 = vsel %vm562, %v534, 0
        %v567 = vsel %vm562, %v535, 0
        %v570 = vsel %vm562, %v536, 0
        %v573 = vsel %vm562, %v537, 0
        %575 = vmatprep.subr.mxu0 %v527
        %576 = vmatpush1.msra.mxu0 %v526
        %577 = vmatprep.subr.mxu0 %v529
        %578 = vmatpush1.msra.mxu0 %v528
        %579 = vmatprep.subr.mxu0 %v531
        %580 = vmatpush1.msra.mxu0 %v530
        %581 = vmatprep.subr.mxu0 %v533
        %582 = vmatpush1.msra.mxu0 %v532
        %583 = vmatprep.subr.mxu0 0.0
        %584 = vmatpush1.msra.mxu0 0.0
        %585 = vmatprep.subr.mxu0 0.0
        %586 = vmatpush1.msra.mxu0 0.0
        %587 = vmatprep.subr.mxu0 0.0
        %588 = vmatpush1.msra.mxu0 0.0
        %589 = vmatprep.subr.mxu0 0.0
        %590 = vmatpush1.msra.mxu0 0.0
        %591 = vmatprep.subr.mxu0 0.0
        %592 = vmatpush1.msra.mxu0 0.0
        %593 = vmatprep.subr.mxu0 0.0
        %594 = vmatpush1.msra.mxu0 0.0
        %595 = vmatprep.subr.mxu0 0.0
        %596 = vmatpush1.msra.mxu0 0.0
        %597 = vmatprep.subr.mxu0 0.0
        %598 = vmatpush1.msra.mxu0 0.0
        %599 = vmatprep.subr.mxu0 0.0
        %600 = vmatpush1.msra.mxu0 0.0
        %601 = vmatprep.subr.mxu0 0.0
        %602 = vmatpush1.msra.mxu0 0.0
        %603 = vmatprep.subr.mxu0 0.0
        %604 = vmatpush1.msra.mxu0 0.0
        %605 = vmatprep.subr.mxu0 0.0
        %606 = vmatpush1.msra.mxu0 0.0
        %607 = vmatprep.subr.mxu0 0.0
        %608 = vmatpush1.msra.mxu0 0.0
        %609 = vmatprep.subr.mxu0 0.0
        %610 = vmatpush1.msra.mxu0 0.0
        %611 = vmatprep.subr.mxu0 0.0
        %612 = vmatpush1.msra.mxu0 0.0
        %613 = vmatprep.subr.mxu0 0.0
        %614 = vmatpush1.msra.mxu0 0.0
        %615 = vmatprep.subr.mxu0 0.0
        %616 = vmatpush1.msra.mxu0 0.0
        %617 = vmatprep.subr.mxu0 0.0
        %618 = vmatpush1.msra.mxu0 0.0
        %619 = vmatprep.subr.mxu0 0.0
        %620 = vmatpush1.msra.mxu0 0.0
        %621 = vmatprep.subr.mxu0 0.0
        %622 = vmatpush1.msra.mxu0 0.0
        %623 = vmatprep.subr.mxu0 0.0
        %624 = vmatpush1.msra.mxu0 0.0
        %625 = vmatprep.subr.mxu0 0.0
        %626 = vmatpush1.msra.mxu0 0.0
        %627 = vmatprep.subr.mxu0 0.0
        %628 = vmatpush1.msra.mxu0 0.0
        %629 = vmatprep.subr.mxu0 0.0
        %630 = vmatpush1.msra.mxu0 0.0
        %631 = vmatprep.subr.mxu0 0.0
        %632 = vmatpush1.msra.mxu0 0.0
        %633 = vmatprep.subr.mxu0 0.0
        %634 = vmatpush1.msra.mxu0 0.0
        %635 = vmatprep.subr.mxu0 0.0
        %636 = vmatpush1.msra.mxu0 0.0
        %637 = vmatprep.subr.mxu0 0.0
        %638 = vmatpush1.msra.mxu0 0.0
        %639 = vmatprep.mubr.f32.mxu0 0.0
        %640 = vmatmul.mubr.f32.gmra.mrb[0].mxu0 %v564
        %v641 = vpop.f32.mrb[0].mxu0
        %v642 = vadd.f32 %v545, %v641
        %v643 = vpop.f32.mrb[0].mxu0
        %v644 = vadd.f32 %v545, %v643
        %645 = vmatprep.mubr.f32.mxu0 0.0
        %646 = vmatmul.mubr.f32.gmra.mrb[0].mxu0 %v567
        %v647 = vpop.f32.mrb[0].mxu0
        %v648 = vadd.f32 %v550, %v647
        %v649 = vpop.f32.mrb[0].mxu0
        %v650 = vadd.f32 %v550, %v649
        %651 = vmatprep.mubr.f32.mxu0 0.0
        %652 = vmatmul.mubr.f32.gmra.mrb[0].mxu0 %v570
        %v653 = vpop.f32.mrb[0].mxu0
        %v654 = vadd.f32 %v555, %v653
        %v655 = vpop.f32.mrb[0].mxu0
        %v656 = vadd.f32 %v555, %v655
        %657 = vmatprep.mubr.f32.mxu0 0.0
        %658 = vmatmul.mubr.f32.gmra.mrb[0].mxu0 %v573
        %v659 = vpop.f32.mrb[0].mxu0
        %v660 = vadd.f32 %v560, %v659
        %v661 = vpop.f32.mrb[0].mxu0
        %v662 = vadd.f32 %v560, %v661
        %663 = vdwg.mxu0
        %664 = vst [vmem:[%s254] sm:$0xff] %v642
        %665 = vst [vmem:[%s254 + $0x8] sm:$0xff] %v644
        %666 = vst [vmem:[%s254 + $0x10] sm:$0xff] %v648
        %667 = vst [vmem:[%s254 + $0x18] sm:$0xff] %v650
        %668 = vst [vmem:[%s254 + $0x20] sm:$0xff] %v654
        %669 = vst [vmem:[%s254 + $0x28] sm:$0xff] %v656
        %670 = vst [vmem:[%s254 + $0x30] sm:$0xff] %v660
        %671 = vst [vmem:[%s254 + $0x38] sm:$0xff] %v662
        %s672 = sand.u32 %s153, 1
        %s673 = scalar_lea.sflag [#allocation3], %s672
        %s674 = sand.u32 %s153, 1
        %s675 = smul.addr %s674, 64
        %s676 = scalar_lea.vmem [#allocation2], %s675
        // Predicated region
        $region41: #{position_embedding_learned.1} parent=39 // pred_check
          %p677 = pneg %p163
        $region42: #{position_embedding_learned.1} parent=39 // pred_check_branch
          %679 = sbr.rel (%p677) target = $region44
        $region43: #{position_embedding_learned.1} parent=39 // pred_region
          %s680 = smul.u32 2, %s24
          %s681 = ssub.s32 3, %s680
          %p682 = scmp.lt.s32.totalorder %s681, 2
          %s683 = scalar_select %p682, %s681, 2
          %s684 = smul.u32 512, %s683
          %s686 = ssub.s32 1024, %s684
          %687 = vsyncadd %s673, %s686
          %p688 = scmp.ne.s32.totalorder 0, %s684
          %s689 = smul.addr %s23, 12
          %s690 = sadd.s32 %s680, %s689
          %s691 = smul.addr %s690, 128
          %s692 = scalar_lea.hbm %s5, %s691
          %s693 = smul.u32 %s683, 8
          %s694 = smul.u32 %s693, 4
          %s695 = sshll.u32 %s676, 4
          %s696 = int_to_ptr.vmem [resolvable:$true] %s695
          %s697 = sshll.u32 %s694, 4
          %701 = dma.vmem_to_hbm [thread:$0]  (%p688), %s696, %s697, %s692, %s673, 256, 384, %s693
        $region44: #{position_embedding_learned.1} parent=39 // pred_fallthru
          _
      $region40: #{position_embedding_learned.1} parent=5 // pred_fallthru
        _
      %p702 = scmp.le.s32.totalorder 2, %s14
      // Predicated region
      $region45: #{position_embedding_learned.1} parent=5 // pred_check
        %p703 = pneg %p702
      $region46: #{position_embedding_learned.1} parent=5 // pred_check_branch
        %705 = sbr.rel (%p703) target = $region48
      $region47: #{position_embedding_learned.1} parent=5 // pred_region
        %s706 = ssub.s32 %s14, 2
        // Predicated region
        $region49: #{position_embedding_learned.1} parent=47 // pred_check
          %p707 = pneg %p169
        $region50: #{position_embedding_learned.1} parent=47 // pred_check_branch
          %709 = sbr.rel (%p707) target = $region52
        $region51: #{position_embedding_learned.1} parent=47 // pred_region
          %s710 = sand.u32 %s154, 1
          %s711 = scalar_lea.sflag [#allocation3], %s710
          %s712 = sand.u32 %s154, 1
          %s713 = smul.addr %s712, 64
          %s714 = scalar_lea.vmem [#allocation2], %s713
          %715 = dma.done %s711, 1024
        $region52: #{position_embedding_learned.1} parent=47 // pred_fallthru
          _
      $region48: #{position_embedding_learned.1} parent=5 // pred_fallthru
        _
    $region6: #{position_embedding_learned.1} parent=1 // loop_footer
      %s18 = sadd.s32 1, %s14
    $region7: #{position_embedding_learned.1} parent=1 // loop_footer_branch
      %13 = sbr.rel target = $region3
    $region8: #{position_embedding_learned.1} parent=1 // loop_exit
      _
    %716 = vsyncpa [#allocation3], 1
    %s717 = scalar_lea.sflag [#allocation3], 1
    %718 = vsyncpa %s717, 1

</llo_original>
